<compile_context>
chip_gen: v5e
topology: v5e:2x2
jax: 0.10.0
libtpu: 0.0.40
codegen_flags: <defaults>
</compile_context>

<pallas_src>
import functools

import jax
import jax.numpy as jnp
from jax import lax
from jax.experimental import pallas as pl
from jax.experimental.pallas import tpu as pltpu


def _self_attention_kernel(x_ref, w_ref, b_ref, o_ref, *,
                           dq, scale_inv, mxu_dtype):
    # x_ref: (Bb, N, Din) tile of the batch; w_ref: (Din, Dq+Dk+Dv); b_ref: (1, Dq+Dk+Dv)
    x = x_ref[...]
    w = w_ref[...]
    b = b_ref[...]

    # Fused QKV projection: one MXU pass over (Bb*N) rows, f32 accumulation.
    qkv = lax.dot_general(
        x.astype(mxu_dtype), w.astype(mxu_dtype),
        dimension_numbers=(((2,), (0,)), ((), ())),
        preferred_element_type=jnp.float32)                      # (Bb, N, Dq+Dk+Dv)
    qkv = qkv + b                                                # bias broadcast

    q = qkv[:, :, :dq] * scale_inv        # fold 1/sqrt(Dq) into q (O(N*Dq), not O(N^2))
    k = qkv[:, :, dq:2 * dq]
    v = qkv[:, :, 2 * dq:]

    # Batched Q K^T: contract last dims of both operands -> no explicit transpose.
    sim = lax.dot_general(
        q.astype(mxu_dtype), k.astype(mxu_dtype),
        dimension_numbers=(((2,), (2,)), ((0,), (0,))),
        preferred_element_type=jnp.float32)                      # (Bb, N, N)

    # Softmax over the last axis (dim=2 in the PyTorch module), f32 on VPU/EUP.
    sim = sim - jnp.max(sim, axis=-1, keepdims=True)
    p = jnp.exp(sim)
    attn = p * pl.reciprocal(jnp.sum(p, axis=-1, keepdims=True), approx=True)

    # Attention @ V (batched), f32 accumulation.
    out = lax.dot_general(
        attn.astype(mxu_dtype), v.astype(mxu_dtype),
        dimension_numbers=(((2,), (1,)), ((0,), (0,))),
        preferred_element_type=jnp.float32)                      # (Bb, N, Dv)

    o_ref[...] = out.astype(o_ref.dtype)


def self_attention(x, wq, bq, wk, bk, wv, bv, *, query_dim,
                   block_b=None, mxu_dtype=None):
    """x: (B, N, Din); wq/wk/wv: (Din, D*); bq/bk/bv: (1, D*) or (D*,)."""
    B, N, Din = x.shape
    Dq, Dk, Dv = wq.shape[1], wk.shape[1], wv.shape[1]
    assert Dq == Dk == query_dim
    Dqkv = Dq + Dk + Dv

    # Fuse the three projections into a single weight / bias (done once in the
    # wrapper; XLA hoists this out of any surrounding jit loop).
    w_qkv = jnp.concatenate([wq, wk, wv], axis=1)                          # (Din, Dqkv)
    b_qkv = jnp.concatenate(
        [bq.reshape(1, -1), bk.reshape(1, -1), bv.reshape(1, -1)], axis=1)  # (1, Dqkv)

    if mxu_dtype is None:
        mxu_dtype = x.dtype

    if block_b is None:
        # Pack batch elements per grid step so block_b * N fills ~128 MXU rows,
        # while staying a divisor of B.
        target = max(1, 128 // max(N, 1))
        block_b = 1
        for d in range(1, B + 1):
            if B % d == 0 and d <= target:
                block_b = d
    assert B % block_b == 0, (B, block_b)

    scale_inv = 1.0 / (float(query_dim) ** 0.5)
    kernel = functools.partial(
        _self_attention_kernel, dq=Dq, scale_inv=scale_inv, mxu_dtype=mxu_dtype)

    grid_spec = pltpu.PrefetchScalarGridSpec(
        num_scalar_prefetch=0,
        grid=(B // block_b,),
        in_specs=[
            pl.BlockSpec((block_b, N, Din), lambda b: (b, 0, 0)),   # x
            pl.BlockSpec((Din, Dqkv), lambda b: (0, 0)),            # fused W_qkv
            pl.BlockSpec((1, Dqkv), lambda b: (0, 0)),              # fused b_qkv
        ],
        out_specs=pl.BlockSpec((block_b, N, Dv), lambda b: (b, 0, 0)),
    )

    return pl.pallas_call(
        kernel,
        out_shape=jax.ShapeDtypeStruct((B, N, Dv), x.dtype),
        grid_spec=grid_spec,
        compiler_params=pltpu.CompilerParams(
            dimension_semantics=("parallel",)),
    )(x, w_qkv, b_qkv)


def self_attention_ref(x, wq, bq, wk, bk, wv, bv, *, query_dim):
    """Plain-JAX reference mirroring the PyTorch forward pass."""
    q = x @ wq + bq
    k = x @ wk + bk
    v = x @ wv + bv
    sim = jnp.einsum("bnd,bmd->bnm", q, k) / (float(query_dim) ** 0.5)
    attn = jax.nn.softmax(sim, axis=2)
    return jnp.einsum("bnm,bmd->bnd", attn, v)


if __name__ == "__main__":
    # Small shapes consistent with the module's forward.
    batch, num_tokens = 2, 8
    input_dim, query_dim, key_dim, value_dim = 32, 16, 16, 16
    assert query_dim == key_dim

    key = jax.random.PRNGKey(0)
    kx, kwq, kbq, kwk, kbk, kwv, kbv = jax.random.split(key, 7)

    x = jax.random.normal(kx, (batch, num_tokens, input_dim), dtype=jnp.float32)

    # Deterministic parameter init (nn.Linear-like uniform), stored as (in, out).
    def linear_init(kw, kb, in_dim, out_dim):
        bound = 1.0 / (in_dim ** 0.5)
        w = jax.random.uniform(kw, (in_dim, out_dim), minval=-bound, maxval=bound,
                               dtype=jnp.float32)
        b = jax.random.uniform(kb, (1, out_dim), minval=-bound, maxval=bound,
                               dtype=jnp.float32)
        return w, b

    wq, bq = linear_init(kwq, kbq, input_dim, query_dim)
    wk, bk = linear_init(kwk, kbk, input_dim, key_dim)
    wv, bv = linear_init(kwv, kbv, input_dim, value_dim)

    ref = self_attention_ref(x, wq, bq, wk, bk, wv, bv, query_dim=query_dim)

    # f32 MXU operands (default): tight tolerance (approx reciprocal only).
    out_f32 = self_attention(x, wq, bq, wk, bk, wv, bv, query_dim=query_dim)
    out_f32 = jax.block_until_ready(out_f32)
    assert out_f32.shape == (batch, num_tokens, value_dim)
    assert jnp.allclose(out_f32, ref, atol=2e-3, rtol=2e-3)

    # bf16 MXU operands with f32 accumulation (v6e/v7x fast path): looser tolerance.
    out_bf16 = self_attention(x, wq, bq, wk, bk, wv, bv, query_dim=query_dim,
                              mxu_dtype=jnp.bfloat16)
    out_bf16 = jax.block_until_ready(out_bf16)
    assert out_bf16.shape == (batch, num_tokens, value_dim)
    assert jnp.allclose(out_bf16, ref, atol=5e-2, rtol=5e-2)

    print("KERNEL_OK")
</pallas_src>

<mosaic_0001>
module attributes {stable_mosaic.version = 11 : i64} {
  func.func @_self_attention_kernel(%arg0: i32, %arg1: memref<2x8x32xf32, #tpu.memory_space<vmem>>, %arg2: memref<32x48xf32, #tpu.memory_space<vmem>>, %arg3: memref<1x48xf32, #tpu.memory_space<vmem>>, %arg4: memref<2x8x16xf32, #tpu.memory_space<vmem>>) attributes {dimension_semantics = [#tpu.dimension_semantics<parallel>], iteration_bounds = array<i64: 1>, scalar_prefetch = 0 : i64, scratch_operands = 0 : i64, tpu.core_type = #tpu.core_type<tc>, window_params = [{transform_indices = @transform_0, window_bounds = array<i64: 2, 8, 32>}, {pipeline_mode = #tpu.pipeline_mode<synchronous>, transform_indices = @transform_1, window_bounds = array<i64: 32, 48>}, {pipeline_mode = #tpu.pipeline_mode<synchronous>, transform_indices = @transform_2, window_bounds = array<i64: 1, 48>}, {transform_indices = @transform_3, window_bounds = array<i64: 2, 8, 16>}]} {
    %c0 = arith.constant 0 : index
    %c0_0 = arith.constant 0 : index
    %c0_1 = arith.constant 0 : index
    %0 = vector.load %arg1[%c0, %c0_0, %c0_1] : memref<2x8x32xf32, #tpu.memory_space<vmem>>, vector<2x8x32xf32>
    %c0_2 = arith.constant 0 : index
    %c0_3 = arith.constant 0 : index
    %1 = vector.load %arg2[%c0_2, %c0_3] : memref<32x48xf32, #tpu.memory_space<vmem>>, vector<32x48xf32>
    %c0_4 = arith.constant 0 : index
    %c0_5 = arith.constant 0 : index
    %2 = vector.load %arg3[%c0_4, %c0_5] : memref<1x48xf32, #tpu.memory_space<vmem>>, vector<1x48xf32>
    %cst = arith.constant dense<0.000000e+00> : vector<2x8x48xf32>
    %3 = tpu.matmul %0, %1, %cst {dimension_numbers = #tpu.dot_dimension_numbers<[2], [0], [0, 1], [1], [0, 0, 0, 1, 1, 1], [], []>} : vector<2x8x32xf32>, vector<32x48xf32>, vector<2x8x48xf32> -> vector<2x8x48xf32>
    %4 = vector.shape_cast %2 : vector<1x48xf32> to vector<1x1x48xf32>
    %5 = vector.broadcast %4 : vector<1x1x48xf32> to vector<2x8x48xf32>
    %6 = arith.addf %3, %5 : vector<2x8x48xf32>
    %7 = vector.extract_strided_slice %6 {offsets = [0, 0, 0], sizes = [2, 8, 16], strides = [1, 1, 1]} : vector<2x8x48xf32> to vector<2x8x16xf32>
    %cst_6 = arith.constant 2.500000e-01 : f32
    %8 = vector.broadcast %cst_6 : f32 to vector<2x8x16xf32>
    %9 = arith.mulf %7, %8 : vector<2x8x16xf32>
    %10 = vector.extract_strided_slice %6 {offsets = [0, 0, 16], sizes = [2, 8, 16], strides = [1, 1, 1]} : vector<2x8x48xf32> to vector<2x8x16xf32>
    %11 = vector.extract_strided_slice %6 {offsets = [0, 0, 32], sizes = [2, 8, 16], strides = [1, 1, 1]} : vector<2x8x48xf32> to vector<2x8x16xf32>
    %cst_7 = arith.constant dense<0.000000e+00> : vector<2x8x8xf32>
    %12 = tpu.matmul %9, %10, %cst_7 {dimension_numbers = #tpu.dot_dimension_numbers<[2], [2], [1], [1], [0, 0, 0, 1, 1, 1], [0], [0]>} : vector<2x8x16xf32>, vector<2x8x16xf32>, vector<2x8x8xf32> -> vector<2x8x8xf32>
    %cst_8 = arith.constant dense<0xFF800000> : vector<2x8xf32>
    %13 = vector.multi_reduction <maximumf>, %12, %cst_8 [2] : vector<2x8x8xf32> to vector<2x8xf32>
    %14 = vector.shape_cast %13 : vector<2x8xf32> to vector<2x8x1xf32>
    %15 = vector.broadcast %14 : vector<2x8x1xf32> to vector<2x8x8xf32>
    %16 = arith.subf %12, %15 : vector<2x8x8xf32>
    %17 = math.exp %16 : vector<2x8x8xf32>
    %cst_9 = arith.constant dense<0.000000e+00> : vector<2x8xf32>
    %18 = vector.multi_reduction <add>, %17, %cst_9 [2] : vector<2x8x8xf32> to vector<2x8xf32>
    %19 = vector.shape_cast %18 : vector<2x8xf32> to vector<2x8x1xf32>
    %20 = tpu.reciprocal %19 {approx = true} : vector<2x8x1xf32> -> vector<2x8x1xf32>
    %21 = vector.broadcast %20 : vector<2x8x1xf32> to vector<2x8x8xf32>
    %22 = arith.mulf %17, %21 : vector<2x8x8xf32>
    %cst_10 = arith.constant dense<0.000000e+00> : vector<2x8x16xf32>
    %23 = tpu.matmul %22, %11, %cst_10 {dimension_numbers = #tpu.dot_dimension_numbers<[2], [1], [1], [2], [0, 0, 0, 1, 1, 2], [0], [0]>} : vector<2x8x8xf32>, vector<2x8x16xf32>, vector<2x8x16xf32> -> vector<2x8x16xf32>
    %c0_11 = arith.constant 0 : index
    %c0_12 = arith.constant 0 : index
    %c0_13 = arith.constant 0 : index
    %24 = vector.load %arg4[%c0_11, %c0_12, %c0_13] : memref<2x8x16xf32, #tpu.memory_space<vmem>>, vector<2x8x16xf32>
    tpu.vector_store %arg4[%c0_11, %c0_12, %c0_13], %23 {strides = array<i32>} : memref<2x8x16xf32, #tpu.memory_space<vmem>>, vector<2x8x16xf32>,
    return
  }
  func.func @transform_0(%arg0: i32) -> (i32, i32, i32) {
    %c0_i32 = arith.constant 0 : i32
    %c0_i32_0 = arith.constant 0 : i32
    %c0_i32_1 = arith.constant 0 : i32
    return %arg0, %c0_i32, %c0_i32_0 : i32, i32, i32
  }
  func.func @transform_1(%arg0: i32) -> (i32, i32) {
    %c0_i32 = arith.constant 0 : i32
    %c0_i32_0 = arith.constant 0 : i32
    %c0_i32_1 = arith.constant 0 : i32
    return %c0_i32, %c0_i32_0 : i32, i32
  }
  func.func @transform_2(%arg0: i32) -> (i32, i32) {
    %c0_i32 = arith.constant 0 : i32
    %c0_i32_0 = arith.constant 0 : i32
    %c0_i32_1 = arith.constant 0 : i32
    return %c0_i32, %c0_i32_0 : i32, i32
  }
  func.func @transform_3(%arg0: i32) -> (i32, i32, i32) {
    %c0_i32 = arith.constant 0 : i32
    %c0_i32_0 = arith.constant 0 : i32
    %c0_i32_1 = arith.constant 0 : i32
    return %arg0, %c0_i32, %c0_i32_0 : i32, i32, i32
  }
}

</mosaic_0001>

<llo_original>
// kernel: tpu_custom_call.1
$region0: #{tpu_custom_call.1}
  #allocation0 [shape = 'u32[]', space=smem, size = 0x4, offset = 0x4, fixed_abs, tag = 'smem constant byte address 0x4 - core index']
  #allocation1 [shape = 'u32[72,128]{1,0:T(1,128)}', space=vmem, size = 0x9000, scoped, tag = 'internal scratch']
  %s0 = inlined_call_operand.hbm [shape: f32[2,8,32], index: 0, kind: input, shape index: {}]
  %s1 = inlined_call_operand.hbm [shape: f32[32,48], index: 1, kind: input, shape index: {}]
  %s2 = inlined_call_operand.vmem [shape: f32[1,48], index: 2, kind: input, shape index: {}]
  %s3 = inlined_call_operand.hbm [shape: f32[2,8,16], index: 3, kind: output, shape index: {}]
  %s4 = sld [smem:[#allocation0]]
  $region30: #{tpu_custom_call.1} parent=0
    _
  %s6 = ssub.s32 1, %s4
  %s7 = scalar_select 0, %s6, %s4
  $region1: #{tpu_custom_call.1} parent=0
    #allocation2 [shape = 'u8[8192]{0}', space=vmem, size = 0x2000, scoped, tag = 'input window, operand 0, single buffered']
    #allocation3 [shape = 's32[1]{0}', space=sflag, size = 0x4, scoped, tag = 'scoped memory for tpu_custom_call.1']
    #allocation4 [shape = 's32[1]{0}', space=sflag, size = 0x4, scoped, tag = 'scoped memory for tpu_custom_call.1']
    #allocation5 [shape = 'u8[16384]{0}', space=vmem, size = 0x4000, scoped, tag = 'input window, operand 1, single buffered']
    #allocation6 [shape = 's32[1]{0}', space=sflag, size = 0x4, scoped, tag = 'scoped memory for tpu_custom_call.1']
    #allocation7 [shape = 'u8[8192]{0}', space=vmem, size = 0x2000, scoped, tag = 'output window, operand 0, single buffered']
    %8 = vsyncpa [#allocation3], 0
    %9 = vsyncpa [#allocation6], 0
    %10 = vsyncpa [#allocation4], 0
    // Predicated region
    $region2: #{tpu_custom_call.1} parent=1 // pred_check
      _
    $region3: #{tpu_custom_call.1} parent=1 // pred_check_branch
      %12 = sbr.rel (0) target = $region5
    $region4: #{tpu_custom_call.1} parent=1 // pred_region
      %14 = vsyncadd [#allocation3], 0
      %s15 = sshll.u32 %s0, 4
      %s16 = int_to_ptr.hbm [resolvable:$true] %s15
      %s17 = sshll.u32 [#allocation2], 4
      %s18 = int_to_ptr.vmem [resolvable:$true] %s17
      %23 = dma.hbm_to_vmem [thread:$0]  %s16, 256, %s18, [#allocation3], 128, 128, 8
    $region5: #{tpu_custom_call.1} parent=1 // pred_fallthru
      _
    // Predicated region
    $region6: #{tpu_custom_call.1} parent=1 // pred_check
      _
    $region7: #{tpu_custom_call.1} parent=1 // pred_check_branch
      %25 = sbr.rel (0) target = $region9
    $region8: #{tpu_custom_call.1} parent=1 // pred_region
      %27 = vsyncadd [#allocation6], 0
      %s28 = sshll.u32 %s1, 4
      %s29 = int_to_ptr.hbm [resolvable:$true] %s28
      %s30 = sshll.u32 [#allocation5], 4
      %s31 = int_to_ptr.vmem [resolvable:$true] %s30
      %36 = dma.hbm_to_vmem [thread:$0]  %s29, 512, %s31, [#allocation6], 128, 128, 8
    $region9: #{tpu_custom_call.1} parent=1 // pred_fallthru
      _
    // Predicated region
    $region10: #{tpu_custom_call.1} parent=1 // pred_check
      _
    $region11: #{tpu_custom_call.1} parent=1 // pred_check_branch
      %38 = sbr.rel (0) target = $region13
    $region12: #{tpu_custom_call.1} parent=1 // pred_region
      _
    $region13: #{tpu_custom_call.1} parent=1 // pred_fallthru
      _
    // Predicated region
    $region14: #{tpu_custom_call.1} parent=1 // pred_check
      _
    $region15: #{tpu_custom_call.1} parent=1 // pred_check_branch
      %40 = sbr.rel (0) target = $region17
    $region16: #{tpu_custom_call.1} parent=1 // pred_region
      %42 = dma.done [#allocation3], 256
    $region17: #{tpu_custom_call.1} parent=1 // pred_fallthru
      _
    // Predicated region
    $region18: #{tpu_custom_call.1} parent=1 // pred_check
      _
    $region19: #{tpu_custom_call.1} parent=1 // pred_check_branch
      %44 = sbr.rel (0) target = $region21
    $region20: #{tpu_custom_call.1} parent=1 // pred_region
      %46 = dma.done [#allocation6], 512
    $region21: #{tpu_custom_call.1} parent=1 // pred_fallthru
      _
    %v47 = vld [vmem:[#allocation2] sm:$0xff]
    %v48 = vld [vmem:[#allocation2 + $0x8] sm:$0xff]
    %v49 = vld [vmem:[#allocation5] sm:$0xff]
    %v50 = vld [vmem:[#allocation5 + $0x8] sm:$0xff]
    %v51 = vld [vmem:[#allocation5 + $0x10] sm:$0xff]
    %v52 = vld [vmem:[#allocation5 + $0x18] sm:$0xff]
    %v53 = vld [vmem:[%s2] sm:$0x1]
    %v55 = vperm.slane %v53, 0
    %vm57 = vcmask 261120
    %v59 = vsel %vm57, %v47, 0
    %v62 = vsel %vm57, %v48, 0
    %64 = vmatpush.msra.mxu0 0.0
    %65 = vmatpush.msra.mxu0 0.0
    %66 = vmatpush.msra.mxu0 0.0
    %67 = vmatpush.msra.mxu0 0.0
    %68 = vmatpush.msra.mxu0 0.0
    %69 = vmatpush.msra.mxu0 0.0
    %70 = vmatpush.msra.mxu0 0.0
    %71 = vmatpush.msra.mxu0 0.0
    %72 = vmatpush.msra.mxu0 0.0
    %73 = vmatpush.msra.mxu0 0.0
    %74 = vmatpush.msra.mxu0 0.0
    %75 = vmatpush.msra.mxu0 0.0
    %76 = vmatpush.msra.mxu0 %v52
    %77 = vmatpush.msra.mxu0 %v51
    %78 = vmatpush.msra.mxu0 %v50
    %79 = vmatpush.msra.mxu0 %v49
    %80 = vmatmul.f32.gmra.mxu0 %v59
    %v81 = vpop.f32.mrf.mxu0
    %v82 = vadd.f32 %v55, %v81
    %83 = vmatmul.f32.gmra.mxu0 %v62
    %v84 = vpop.f32.mrf.mxu0
    %v85 = vadd.f32 %v55, %v84
    %86 = vdwg.mxu0
    %v87 = vmul.f32 %v82, 0.25
    %v88 = vmul.f32 %v85, 0.25
    %90 = vrot.lane.b32.xlu0 %v82, 112
    %v91 = vpop.permute.xlu0 %90
    %vm92 = vcmask 130048
    %v94 = vsel %vm92, %v87, 0
    %v96 = vsel %vm92, %v91, 0
    %98 = vmatpush.xpose.msra.mxu0 0.0
    %99 = vmatpush.xpose.msra.mxu0 0.0
    %100 = vmatpush.xpose.msra.mxu0 0.0
    %101 = vmatpush.xpose.msra.mxu0 0.0
    %102 = vmatpush.xpose.msra.mxu0 0.0
    %103 = vmatpush.xpose.msra.mxu0 0.0
    %104 = vmatpush.xpose.msra.mxu0 0.0
    %105 = vmatpush.xpose.msra.mxu0 0.0
    %106 = vmatpush.xpose.msra.mxu0 0.0
    %107 = vmatpush.xpose.msra.mxu0 0.0
    %108 = vmatpush.xpose.msra.mxu0 0.0
    %109 = vmatpush.xpose.msra.mxu0 0.0
    %110 = vmatpush.xpose.msra.mxu0 0.0
    %111 = vmatpush.xpose.msra.mxu0 0.0
    %112 = vmatpush.xpose.msra.mxu0 0.0
    %113 = vmatpush.xpose.msra.mxu0 %v96
    %114 = vmatmul.f32.gmra.mxu0 %v94
    %v115 = vpop.f32.mrf.mxu0
    %v116 = vadd.f32 0.0, %v115
    %117 = vdwg.mxu0
    %119 = vrot.lane.b32.xlu0 %v85, 112
    %v120 = vpop.permute.xlu0 %119
    %v122 = vsel %vm92, %v88, 0
    %v124 = vsel %vm92, %v120, 0
    %126 = vmatpush.xpose.msra.mxu0 0.0
    %127 = vmatpush.xpose.msra.mxu0 0.0
    %128 = vmatpush.xpose.msra.mxu0 0.0
    %129 = vmatpush.xpose.msra.mxu0 0.0
    %130 = vmatpush.xpose.msra.mxu0 0.0
    %131 = vmatpush.xpose.msra.mxu0 0.0
    %132 = vmatpush.xpose.msra.mxu0 0.0
    %133 = vmatpush.xpose.msra.mxu0 0.0
    %134 = vmatpush.xpose.msra.mxu0 0.0
    %135 = vmatpush.xpose.msra.mxu0 0.0
    %136 = vmatpush.xpose.msra.mxu0 0.0
    %137 = vmatpush.xpose.msra.mxu0 0.0
    %138 = vmatpush.xpose.msra.mxu0 0.0
    %139 = vmatpush.xpose.msra.mxu0 0.0
    %140 = vmatpush.xpose.msra.mxu0 0.0
    %141 = vmatpush.xpose.msra.mxu0 %v124
    %142 = vmatmul.f32.gmra.mxu0 %v122
    %v143 = vpop.f32.mrf.mxu0
    %v144 = vadd.f32 0.0, %v143
    %145 = vdwg.mxu0
    %vm146 = vcmask 64512
    %v147 = vsel %vm146, %v116, -inf
    %148 = vmax.xlane.f32.xlu0 %v147
    %v149 = vpop.xlane.xlu0 %148
    %v150 = vsel %vm146, %v144, -inf
    %151 = vmax.xlane.f32.xlu0 %v150
    %v152 = vpop.xlane.xlu0 %151
    %v153 = vsub.f32 %v116, %v149
    %v154 = vsub.f32 %v144, %v152
    %v155 = vmul.f32 %v153, 1.442695
    %v156 = vpow.pop %v155
    %v157 = vmul.f32 %v154, 1.442695
    %v158 = vpow.pop %v157
    %v159 = vsel %vm146, %v156, 0.0
    %160 = vadd.xlane.f32.xlu0 %v159
    %v161 = vpop.xlane.xlu0 %160
    %v162 = vsel %vm146, %v158, 0.0
    %163 = vadd.xlane.f32.xlu0 %v162
    %v164 = vpop.xlane.xlu0 %163
    %v165 = vrcp.pop %v161
    %v166 = vrcp.pop %v164
    %v167 = vmul.f32 %v156, %v165
    %v168 = vmul.f32 %v158, %v166
    %169 = vrot.lane.b32.xlu0 %v82, 96
    %v170 = vpop.permute.xlu0 %169
    %v173 = vsel %vm146, %v167, 0
    %175 = vmatpush.msra.mxu0 0.0
    %176 = vmatpush.msra.mxu0 0.0
    %177 = vmatpush.msra.mxu0 0.0
    %178 = vmatpush.msra.mxu0 0.0
    %179 = vmatpush.msra.mxu0 0.0
    %180 = vmatpush.msra.mxu0 0.0
    %181 = vmatpush.msra.mxu0 0.0
    %182 = vmatpush.msra.mxu0 0.0
    %183 = vmatpush.msra.mxu0 0.0
    %184 = vmatpush.msra.mxu0 0.0
    %185 = vmatpush.msra.mxu0 0.0
    %186 = vmatpush.msra.mxu0 0.0
    %187 = vmatpush.msra.mxu0 0.0
    %188 = vmatpush.msra.mxu0 0.0
    %189 = vmatpush.msra.mxu0 0.0
    %190 = vmatpush.msra.mxu0 %v170
    %191 = vmatmul.f32.gmra.mxu0 %v173
    %v192 = vpop.f32.mrf.mxu0
    %v193 = vadd.f32 0.0, %v192
    %194 = vdwg.mxu0
    %195 = vrot.lane.b32.xlu0 %v85, 96
    %v196 = vpop.permute.xlu0 %195
    %v199 = vsel %vm146, %v168, 0
    %201 = vmatpush.msra.mxu0 0.0
    %202 = vmatpush.msra.mxu0 0.0
    %203 = vmatpush.msra.mxu0 0.0
    %204 = vmatpush.msra.mxu0 0.0
    %205 = vmatpush.msra.mxu0 0.0
    %206 = vmatpush.msra.mxu0 0.0
    %207 = vmatpush.msra.mxu0 0.0
    %208 = vmatpush.msra.mxu0 0.0
    %209 = vmatpush.msra.mxu0 0.0
    %210 = vmatpush.msra.mxu0 0.0
    %211 = vmatpush.msra.mxu0 0.0
    %212 = vmatpush.msra.mxu0 0.0
    %213 = vmatpush.msra.mxu0 0.0
    %214 = vmatpush.msra.mxu0 0.0
    %215 = vmatpush.msra.mxu0 0.0
    %216 = vmatpush.msra.mxu0 %v196
    %217 = vmatmul.f32.gmra.mxu0 %v199
    %v218 = vpop.f32.mrf.mxu0
    %v219 = vadd.f32 0.0, %v218
    %220 = vdwg.mxu0
    %221 = vst.msk [vmem:[#allocation7] sm:$0xff] %vm92, %v193
    %222 = vst.msk [vmem:[#allocation7 + $0x8] sm:$0xff] %vm92, %v219
    // Predicated region
    $region22: #{tpu_custom_call.1} parent=1 // pred_check
      _
    $region23: #{tpu_custom_call.1} parent=1 // pred_check_branch
      %224 = sbr.rel (0) target = $region25
    $region24: #{tpu_custom_call.1} parent=1 // pred_region
      %226 = vsyncadd [#allocation4], 0
      %s227 = sshll.u32 [#allocation7], 4
      %s228 = int_to_ptr.vmem [resolvable:$true] %s227
      %s229 = sshll.u32 %s3, 4
      %s230 = int_to_ptr.hbm [resolvable:$true] %s229
      %235 = dma.vmem_to_hbm [thread:$0]  %s228, 256, %s230, [#allocation4], 128, 128, 8
    $region25: #{tpu_custom_call.1} parent=1 // pred_fallthru
      _
    // Predicated region
    $region26: #{tpu_custom_call.1} parent=1 // pred_check
      _
    $region27: #{tpu_custom_call.1} parent=1 // pred_check_branch
      %237 = sbr.rel (0) target = $region29
    $region28: #{tpu_custom_call.1} parent=1 // pred_region
      %239 = dma.done [#allocation4], 256
    $region29: #{tpu_custom_call.1} parent=1 // pred_fallthru
      _
    %240 = vsyncpa [#allocation3], 1
    %241 = vsyncpa [#allocation6], 1
    %242 = vsyncpa [#allocation4], 1

</llo_original>
